<compile_context>
chip_gen: v5e
topology: v5e:2x2
jax: 0.10.0
libtpu: 0.0.40
codegen_flags: <defaults>
</compile_context>

<pallas_src>
import functools

import jax
import jax.numpy as jnp
from jax import lax
from jax.experimental import pallas as pl
from jax.experimental.pallas import tpu as pltpu


def _apply_att_kernel(x_ref, ah_ref, aw_ref, o_ref, *, w):
    """out = x * expand_H(a_h) * expand_W(a_w) on a flat, lane-dense (tr, H*W) tile.

    x_ref : (tr, tc)           flat spatial tile, tc = reps * w  (reps == H here)
    ah_ref: (tr, 2*reps) bf16  [a_h_hi | a_h_lo]  (hi/lo split of f32 a_h)
    aw_ref: (tr, 2*w)    bf16  [a_w_hi | a_w_lo]
    """
    tc = x_ref.shape[-1]
    reps = tc // w                      # number of spatial rows covered by the tile

    # ---- 0/1 selection masks built in-kernel (no HBM traffic, no extra DMA) ----
    # R[i, k] = 1 iff k // w == i   (expands a_h along the flat axis)
    k_lane = lax.broadcasted_iota(jnp.int32, (reps, tc), 1)
    i_lo = lax.broadcasted_iota(jnp.int32, (reps, tc), 0) * w
    r_bool = (k_lane >= i_lo) & (k_lane < i_lo + w)                    # (reps, tc)

    # Doubled-row version so the hi/lo halves of a_h contract in a single MXU pass.
    k_lane2 = lax.broadcasted_iota(jnp.int32, (2 * reps, tc), 1)
    i_row2 = lax.broadcasted_iota(jnp.int32, (2 * reps, tc), 0)
    i_lo2 = jnp.where(i_row2 < reps, i_row2, i_row2 - reps) * w
    r2 = ((k_lane2 >= i_lo2) & (k_lane2 < i_lo2 + w)).astype(jnp.bfloat16)

    # T[j, k] = 1 iff k % w == j    (expands a_w).  k % w is derived without any
    # integer div/mod: base[k] = (k // w) * w via a masked cross-sublane reduce.
    k1 = lax.broadcasted_iota(jnp.int32, (1, tc), 1)
    base = jnp.sum(jnp.where(r_bool, i_lo, 0), axis=0, keepdims=True)  # (1, tc)
    k_mod = k1 - base                                                  # (1, tc)
    j_row = lax.broadcasted_iota(jnp.int32, (2 * w, tc), 0)
    j_eff = jnp.where(j_row < w, j_row, j_row - w)
    t2 = (k_mod == j_eff).astype(jnp.bfloat16)                         # (2*w, tc)

    # ---- one single-pass bf16 MXU matmul per factor (hi + lo accumulate in f32) ----
    ah_exp = jnp.dot(ah_ref[...], r2, preferred_element_type=jnp.float32)  # (tr, tc)
    aw_exp = jnp.dot(aw_ref[...], t2, preferred_element_type=jnp.float32)  # (tr, tc)

    o_ref[...] = (x_ref[...].astype(jnp.float32) * ah_exp * aw_exp).astype(o_ref.dtype)


def _hi_lo_bf16(a):
    """Split f32 into bf16 hi/lo parts stacked on the last axis (hi + lo ~= a)."""
    hi = a.astype(jnp.bfloat16)
    lo = (a - hi.astype(jnp.float32)).astype(jnp.bfloat16)
    return jnp.concatenate([hi, lo], axis=-1)


def _vmem_budget():
    """Physical-VMEM-aware scoped limit (v7x: 64 MiB/TC vs 128 MiB on v5e/v6e)."""
    try:
        phys = int(pltpu.get_tpu_info().vmem_capacity_bytes)
    except Exception:
        phys = 64 * 1024 * 1024                      # assume the smallest (v7x-safe)
    return phys, min(int(0.70 * phys), 96 * 1024 * 1024)


def coord_att(x, params, *, row_tile=None, bn_eps=1e-5, use_pallas=None):
    n, c, h, w = x.shape
    w1, b1 = params["w1"], params["b1"].reshape(-1)
    gamma, beta = params["gamma"].reshape(-1), params["beta"].reshape(-1)
    mean, var = params["mean"].reshape(-1), params["var"].reshape(-1)
    wh, bh = params["wh"], params["bh"].reshape(-1)
    ww, bw = params["ww"], params["bw"].reshape(-1)

    if wh.shape[0] != c or ww.shape[0] != c:
        raise ValueError("CoordAtt elementwise gating requires oup == inp channels.")

    # ---- fold BatchNorm (inference: running stats) into conv1 ----
    # TODO(synk): BatchNorm uses running statistics (inference mode), not PyTorch's
    # training-mode batch-statistics path.
    scale = gamma * lax.rsqrt(var + bn_eps)               # (mip,)
    w1f = w1 * scale[:, None]                             # (mip, c)
    b1f = b1 * scale + (beta - mean * scale)              # (mip,)

    # ---- XLA prologue: pools + tiny 1x1 convs (f32, HIGHEST matmul precision) ----
    # The two sibling mean-reductions share the same operand; XLA fuses them into a
    # single multi-output fusion (one pass over x).  TODO(synk): if a profile ever
    # shows two passes over x here, fold the pooling into a small Pallas reduce pass.
    xf = x.astype(jnp.float32)
    x_h = xf.mean(axis=3)                                 # (n, c, h)   pool over W
    x_w = xf.mean(axis=2)                                 # (n, c, w)   pool over H
    y = jnp.concatenate([x_h, x_w], axis=2)               # (n, c, h+w)
    hp = lax.Precision.HIGHEST                            # tiny matmuls: keep f32 exact
    y = jnp.einsum('mc,nck->nmk', w1f, y, precision=hp) + b1f[None, :, None]
    y = y * jnp.clip(y + 3.0, 0.0, 6.0) * (1.0 / 6.0)     # h_swish
    a_h = jax.nn.sigmoid(
        jnp.einsum('om,nmk->nok', wh, y[..., :h], precision=hp) + bh[None, :, None])
    a_w = jax.nn.sigmoid(
        jnp.einsum('om,nmk->nok', ww, y[..., h:], precision=hp) + bw[None, :, None])

    rows, hw = n * c, h * w
    vmem_phys, vmem_limit = _vmem_budget()
    mask_bytes = 2 * (2 * h + 2 * w) * hw                 # two in-kernel bf16 masks
    total_bytes = rows * hw * x.dtype.itemsize

    if use_pallas is None:
        # Tiny problems: XLA's fused broadcast-multiply wins (launch/step overhead).
        # Very large spatial maps: the in-kernel masks would eat the VMEM budget.
        # TODO(synk): add W-aligned column tiling of the flat axis for that regime.
        use_pallas = total_bytes >= (4 << 20) and 3 * mask_bytes <= vmem_limit
    if not use_pallas:
        return (xf * a_h[..., None] * a_w[:, :, None, :]).astype(x.dtype)

    # ---- Pallas: lane-dense flat layout for the memory-bound broadcast multiply ----
    x2 = x.reshape(rows, hw)
    # bf16 hi/lo split -> one single-pass bf16 MXU matmul per factor in the kernel
    # reconstructs ~f32-accurate attention values (same HBM bytes as f32 (rows, h)).
    ah2 = _hi_lo_bf16(a_h.astype(jnp.float32).reshape(rows, h))   # (rows, 2h) bf16
    aw2 = _hi_lo_bf16(a_w.astype(jnp.float32).reshape(rows, w))   # (rows, 2w) bf16

    # Row-tile sizing from the VMEM budget: in+out double buffered (4 tiles) plus
    # ~3 tile-sized f32 temporaries (ah_exp, aw_exp, upcast x) plus the masks.
    tile_budget = max(256 * 1024, (vmem_limit - mask_bytes) // 8)
    if row_tile is not None:
        tr = int(row_tile)
    else:
        tr = max(8, (tile_budget // (hw * 4)) // 8 * 8)
        if tr >= rows and rows >= 16:
            # keep >= 2 row tiles so both v7x TensorCores (megacore) get work
            tr = max(8, ((-(-rows // 2)) + 7) // 8 * 8)
    if tr >= rows:
        tr = rows                                         # single full-dim block
    grid = (pl.cdiv(rows, tr),)
    step_bytes = 8 * tr * hw * 4 + mask_bytes
    vmem_limit = int(min(max(vmem_limit, step_bytes), 0.9 * vmem_phys))

    kernel = functools.partial(_apply_att_kernel, w=w)
    out2 = pl.pallas_call(
        kernel,
        out_shape=jax.ShapeDtypeStruct((rows, hw), x.dtype),
        grid_spec=pltpu.PrefetchScalarGridSpec(
            num_scalar_prefetch=0,
            grid=grid,
            in_specs=[
                pl.BlockSpec((tr, hw), lambda r: (r, 0)),      # x tile (lane-dense)
                pl.BlockSpec((tr, 2 * h), lambda r: (r, 0)),   # a_h hi/lo
                pl.BlockSpec((tr, 2 * w), lambda r: (r, 0)),   # a_w hi/lo
            ],
            out_specs=pl.BlockSpec((tr, hw), lambda r: (r, 0)),
        ),
        compiler_params=pltpu.CompilerParams(
            dimension_semantics=("parallel",),
            vmem_limit_bytes=vmem_limit,
        ),
    )(x2, ah2, aw2)
    return out2.reshape(n, c, h, w)


def coord_att_reference(x, p, bn_eps=1e-5):
    """Pure-JAX reference mirroring the PyTorch forward (inference-mode BN)."""
    n, c, h, w = x.shape
    xf = x.astype(jnp.float32)
    x_h = xf.mean(axis=3)                             # (n, c, h)
    x_w = xf.mean(axis=2)                             # (n, c, w)
    y = jnp.concatenate([x_h, x_w], axis=2)           # (n, c, h+w)
    hp = lax.Precision.HIGHEST
    y = jnp.einsum('mc,nck->nmk', p["w1"], y, precision=hp) + p["b1"][None]
    y = p["gamma"][None] * (y - p["mean"][None]) / jnp.sqrt(p["var"][None] + bn_eps) \
        + p["beta"][None]
    y = y * jnp.clip(y + 3.0, 0.0, 6.0) / 6.0
    y_h, y_w = y[:, :, :h], y[:, :, h:]
    a_h = jax.nn.sigmoid(jnp.einsum('om,nmk->nok', p["wh"], y_h, precision=hp) + p["bh"][None])
    a_w = jax.nn.sigmoid(jnp.einsum('om,nmk->nok', p["ww"], y_w, precision=hp) + p["bw"][None])
    return (xf * a_h[..., None] * a_w[:, :, None, :]).astype(x.dtype)


def _make_params(key, inp, oup):
    mip = max(8, inp // 32)
    ks = jax.random.split(key, 10)
    return {
        "w1":    0.3 * jax.random.normal(ks[0], (mip, inp), jnp.float32),
        "b1":    0.1 * jax.random.normal(ks[1], (mip, 1), jnp.float32),
        "gamma": 1.0 + 0.1 * jax.random.normal(ks[2], (mip, 1), jnp.float32),
        "beta":  0.1 * jax.random.normal(ks[3], (mip, 1), jnp.float32),
        "mean":  0.05 * jax.random.normal(ks[4], (mip, 1), jnp.float32),
        "var":   1.0 + 0.1 * jax.random.uniform(ks[5], (mip, 1), jnp.float32),
        "wh":    0.3 * jax.random.normal(ks[6], (oup, mip), jnp.float32),
        "bh":    0.1 * jax.random.normal(ks[7], (oup, 1), jnp.float32),
        "ww":    0.3 * jax.random.normal(ks[8], (oup, mip), jnp.float32),
        "bw":    0.1 * jax.random.normal(ks[9], (oup, 1), jnp.float32),
    }


if __name__ == "__main__":
    key = jax.random.PRNGKey(0)
    fwd = jax.jit(coord_att, static_argnames=("row_tile", "bn_eps", "use_pallas"))

    # --- 1) the module's nominal small shape, forced through the Pallas kernel ---
    n, c, h, w = 2, 4, 16, 16
    params = _make_params(jax.random.fold_in(key, 0), c, c)
    x = jax.random.normal(jax.random.fold_in(key, 1), (n, c, h, w), jnp.float32)
    out = jax.block_until_ready(fwd(x, params, use_pallas=True))
    ref = coord_att_reference(x, params)
    assert out.shape == (n, c, h, w)
    err = float(jnp.max(jnp.abs(out - ref)))
    assert jnp.allclose(out, ref, atol=2e-4, rtol=2e-4), f"max abs err {err}"

    # --- 2) multi-tile grid (3 row tiles, non-128-multiple lane width) ---
    n2, c2, h2, w2 = 3, 8, 24, 40
    params2 = _make_params(jax.random.fold_in(key, 2), c2, c2)
    x2 = jax.random.normal(jax.random.fold_in(key, 3), (n2, c2, h2, w2), jnp.float32)
    out2 = jax.block_until_ready(fwd(x2, params2, row_tile=8, use_pallas=True))
    ref2 = coord_att_reference(x2, params2)
    err2 = float(jnp.max(jnp.abs(out2 - ref2)))
    assert jnp.allclose(out2, ref2, atol=2e-4, rtol=2e-4), f"max abs err {err2}"

    print("KERNEL_OK")
</pallas_src>

<mosaic_0001>
module attributes {stable_mosaic.version = 11 : i64} {
  func.func @_apply_att_kernel(%arg0: i32, %arg1: memref<8x256xf32, #tpu.memory_space<vmem>>, %arg2: memref<8x32xbf16, #tpu.memory_space<vmem>>, %arg3: memref<8x32xbf16, #tpu.memory_space<vmem>>, %arg4: memref<8x256xf32, #tpu.memory_space<vmem>>) attributes {dimension_semantics = [#tpu.dimension_semantics<parallel>], iteration_bounds = array<i64: 1>, scalar_prefetch = 0 : i64, scratch_operands = 0 : i64, tpu.core_type = #tpu.core_type<tc>, window_params = [{transform_indices = @transform_0, window_bounds = array<i64: 8, 256>}, {transform_indices = @transform_1, window_bounds = array<i64: 8, 32>}, {transform_indices = @transform_2, window_bounds = array<i64: 8, 32>}, {transform_indices = @transform_3, window_bounds = array<i64: 8, 256>}]} {
    %0 = tpu.iota {dimensions = array<i32: 1>} : vector<16x256xi32>
    %1 = tpu.iota {dimensions = array<i32: 0>} : vector<16x256xi32>
    %c16_i32 = arith.constant 16 : i32
    %2 = vector.broadcast %c16_i32 : i32 to vector<16x256xi32>
    %3 = arith.muli %1, %2 : vector<16x256xi32>
    %4 = arith.cmpi sge, %0, %3 : vector<16x256xi32>
    %c16_i32_0 = arith.constant 16 : i32
    %5 = vector.broadcast %c16_i32_0 : i32 to vector<16x256xi32>
    %6 = arith.addi %3, %5 : vector<16x256xi32>
    %7 = arith.cmpi slt, %0, %6 : vector<16x256xi32>
    %8 = arith.andi %4, %7 : vector<16x256xi1>
    %9 = tpu.iota {dimensions = array<i32: 1>} : vector<32x256xi32>
    %10 = tpu.iota {dimensions = array<i32: 0>} : vector<32x256xi32>
    %c16_i32_1 = arith.constant 16 : i32
    %11 = vector.broadcast %c16_i32_1 : i32 to vector<32x256xi32>
    %12 = arith.cmpi slt, %10, %11 : vector<32x256xi32>
    %c16_i32_2 = arith.constant 16 : i32
    %13 = vector.broadcast %c16_i32_2 : i32 to vector<32x256xi32>
    %14 = arith.subi %10, %13 : vector<32x256xi32>
    %15 = arith.select %12, %10, %14 : vector<32x256xi1>, vector<32x256xi32>
    %c16_i32_3 = arith.constant 16 : i32
    %16 = vector.broadcast %c16_i32_3 : i32 to vector<32x256xi32>
    %17 = arith.muli %15, %16 : vector<32x256xi32>
    %18 = arith.cmpi sge, %9, %17 : vector<32x256xi32>
    %c16_i32_4 = arith.constant 16 : i32
    %19 = vector.broadcast %c16_i32_4 : i32 to vector<32x256xi32>
    %20 = arith.addi %17, %19 : vector<32x256xi32>
    %21 = arith.cmpi slt, %9, %20 : vector<32x256xi32>
    %22 = arith.andi %18, %21 : vector<32x256xi1>
    %23 = arith.extui %22 : vector<32x256xi1> to vector<32x256xi32>
    %24 = arith.sitofp %23 : vector<32x256xi32> to vector<32x256xf32>
    %25 = arith.truncf %24 : vector<32x256xf32> to vector<32x256xbf16>
    %26 = tpu.iota {dimensions = array<i32: 1>} : vector<1x256xi32>
    %c0_i32 = arith.constant 0 : i32
    %27 = vector.broadcast %c0_i32 : i32 to vector<16x256xi32>
    %28 = arith.select %8, %3, %27 : vector<16x256xi1>, vector<16x256xi32>
    %cst = arith.constant dense<0> : vector<256xi32>
    %29 = vector.multi_reduction <add>, %28, %cst [0] : vector<16x256xi32> to vector<256xi32>
    %30 = vector.shape_cast %29 : vector<256xi32> to vector<1x256xi32>
    %31 = arith.subi %26, %30 : vector<1x256xi32>
    %32 = tpu.iota {dimensions = array<i32: 0>} : vector<32x256xi32>
    %c16_i32_5 = arith.constant 16 : i32
    %33 = vector.broadcast %c16_i32_5 : i32 to vector<32x256xi32>
    %34 = arith.cmpi slt, %32, %33 : vector<32x256xi32>
    %c16_i32_6 = arith.constant 16 : i32
    %35 = vector.broadcast %c16_i32_6 : i32 to vector<32x256xi32>
    %36 = arith.subi %32, %35 : vector<32x256xi32>
    %37 = arith.select %34, %32, %36 : vector<32x256xi1>, vector<32x256xi32>
    %38 = vector.broadcast %31 : vector<1x256xi32> to vector<32x256xi32>
    %39 = arith.cmpi eq, %38, %37 : vector<32x256xi32>
    %40 = arith.extui %39 : vector<32x256xi1> to vector<32x256xi32>
    %41 = arith.sitofp %40 : vector<32x256xi32> to vector<32x256xf32>
    %42 = arith.truncf %41 : vector<32x256xf32> to vector<32x256xbf16>
    %c0 = arith.constant 0 : index
    %c0_7 = arith.constant 0 : index
    %43 = vector.load %arg2[%c0, %c0_7] : memref<8x32xbf16, #tpu.memory_space<vmem>>, vector<8x32xbf16>
    %cst_8 = arith.constant dense<0.000000e+00> : vector<8x256xf32>
    %44 = tpu.matmul %43, %25, %cst_8 {dimension_numbers = #tpu.dot_dimension_numbers<[1], [0], [0], [1], [0, 0, 1, 1], [], []>} : vector<8x32xbf16>, vector<32x256xbf16>, vector<8x256xf32> -> vector<8x256xf32>
    %c0_9 = arith.constant 0 : index
    %c0_10 = arith.constant 0 : index
    %45 = vector.load %arg3[%c0_9, %c0_10] : memref<8x32xbf16, #tpu.memory_space<vmem>>, vector<8x32xbf16>
    %cst_11 = arith.constant dense<0.000000e+00> : vector<8x256xf32>
    %46 = tpu.matmul %45, %42, %cst_11 {dimension_numbers = #tpu.dot_dimension_numbers<[1], [0], [0], [1], [0, 0, 1, 1], [], []>} : vector<8x32xbf16>, vector<32x256xbf16>, vector<8x256xf32> -> vector<8x256xf32>
    %c0_12 = arith.constant 0 : index
    %c0_13 = arith.constant 0 : index
    %47 = vector.load %arg1[%c0_12, %c0_13] : memref<8x256xf32, #tpu.memory_space<vmem>>, vector<8x256xf32>
    %48 = arith.mulf %47, %44 : vector<8x256xf32>
    %49 = arith.mulf %48, %46 : vector<8x256xf32>
    %c0_14 = arith.constant 0 : index
    %c0_15 = arith.constant 0 : index
    %50 = vector.load %arg4[%c0_14, %c0_15] : memref<8x256xf32, #tpu.memory_space<vmem>>, vector<8x256xf32>
    tpu.vector_store %arg4[%c0_14, %c0_15], %49 {strides = array<i32>} : memref<8x256xf32, #tpu.memory_space<vmem>>, vector<8x256xf32>,
    return
  }
  func.func @transform_0(%arg0: i32) -> (i32, i32) {
    %c0_i32 = arith.constant 0 : i32
    %c0_i32_0 = arith.constant 0 : i32
    return %arg0, %c0_i32 : i32, i32
  }
  func.func @transform_1(%arg0: i32) -> (i32, i32) {
    %c0_i32 = arith.constant 0 : i32
    %c0_i32_0 = arith.constant 0 : i32
    return %arg0, %c0_i32 : i32, i32
  }
  func.func @transform_2(%arg0: i32) -> (i32, i32) {
    %c0_i32 = arith.constant 0 : i32
    %c0_i32_0 = arith.constant 0 : i32
    return %arg0, %c0_i32 : i32, i32
  }
  func.func @transform_3(%arg0: i32) -> (i32, i32) {
    %c0_i32 = arith.constant 0 : i32
    %c0_i32_0 = arith.constant 0 : i32
    return %arg0, %c0_i32 : i32, i32
  }
}

</mosaic_0001>

<llo_original>
// kernel: coord_att.1
$region0: #{coord_att.1}
  #allocation0 [shape = 'u32[]', space=smem, size = 0x4, offset = 0x4, fixed_abs, tag = 'smem constant byte address 0x4 - core index']
  #allocation1 [shape = 'u32[72,128]{1,0:T(1,128)}', space=vmem, size = 0x9000, scoped, tag = 'internal scratch']
  %s0 = inlined_call_operand.vmem [shape: f32[8,256], index: 0, kind: input, shape index: {}]
  %s1 = inlined_call_operand.vmem [shape: bf16[8,32], index: 1, kind: input, shape index: {}]
  %s2 = inlined_call_operand.vmem [shape: bf16[8,32], index: 2, kind: input, shape index: {}]
  %s3 = inlined_call_operand.vmem [shape: f32[8,256], index: 3, kind: output, shape index: {}]
  %s4 = sld [smem:[#allocation0]]
  $region22: #{coord_att.1} parent=0
    _
  %s6 = ssub.s32 1, %s4
  %s7 = scalar_select 0, %s6, %s4
  // Predicated region
  $region2: #{coord_att.1} parent=0 // pred_check
    _
  $region3: #{coord_att.1} parent=0 // pred_check_branch
    %9 = sbr.rel (0) target = $region5
  $region4: #{coord_att.1} parent=0 // pred_region
    _
  $region5: #{coord_att.1} parent=0 // pred_fallthru
    _
  // Predicated region
  $region6: #{coord_att.1} parent=0 // pred_check
    _
  $region7: #{coord_att.1} parent=0 // pred_check_branch
    %11 = sbr.rel (0) target = $region9
  $region8: #{coord_att.1} parent=0 // pred_region
    _
  $region9: #{coord_att.1} parent=0 // pred_fallthru
    _
  // Predicated region
  $region10: #{coord_att.1} parent=0 // pred_check
    _
  $region11: #{coord_att.1} parent=0 // pred_check_branch
    %13 = sbr.rel (0) target = $region13
  $region12: #{coord_att.1} parent=0 // pred_region
    _
  $region13: #{coord_att.1} parent=0 // pred_fallthru
    _
  %v15 = vlaneseq
  %v16 = vand.u32 %v15, 127
  %v17 = vadd.s32 %v16, 128
  %v18 = vlaneseq
  %v19 = vshrl.u32 %v18, 7
  %v20 = vadd.s32 %v19, 8
  %v21 = vmul.u32 %v19, 16
  %v22 = vmul.u32 %v20, 16
  %vm23 = vcmp.ge.s32.totalorder %v16, %v21
  %vm24 = vcmp.ge.s32.totalorder %v17, %v21
  %vm25 = vcmp.ge.s32.totalorder %v16, %v22
  %vm26 = vcmp.ge.s32.totalorder %v17, %v22
  %v27 = vadd.s32 %v21, 16
  %v28 = vadd.s32 %v22, 16
  %vm29 = vcmp.lt.s32.totalorder %v16, %v27
  %vm30 = vcmp.lt.s32.totalorder %v17, %v27
  %vm31 = vcmp.lt.s32.totalorder %v16, %v28
  %vm32 = vcmp.lt.s32.totalorder %v17, %v28
  %vm33 = vmand %vm23, %vm29
  %vm34 = vmand %vm24, %vm30
  %vm35 = vmand %vm25, %vm31
  %vm36 = vmand %vm26, %vm32
  %v37 = vadd.s32 %v19, 16
  %v38 = vadd.s32 %v19, 24
  %vm39 = vcmp.lt.s32.totalorder %v19, 16
  %vm40 = vcmp.lt.s32.totalorder %v20, 16
  %vm41 = vcmp.lt.s32.totalorder %v37, 16
  %vm42 = vcmp.lt.s32.totalorder %v38, 16
  %v43 = vsub.s32 %v19, 16
  %v44 = vsub.s32 %v20, 16
  %v45 = vsub.s32 %v38, 16
  %v46 = vsel %vm39, %v19, %v43
  %v47 = vsel %vm40, %v20, %v44
  %v48 = vsel %vm41, %v37, %v19
  %v49 = vsel %vm42, %v38, %v45
  %v50 = vmul.u32 %v46, 16
  %v51 = vmul.u32 %v47, 16
  %v52 = vmul.u32 %v48, 16
  %v53 = vmul.u32 %v49, 16
  %vm54 = vcmp.ge.s32.totalorder %v16, %v50
  %vm55 = vcmp.ge.s32.totalorder %v17, %v50
  %vm56 = vcmp.ge.s32.totalorder %v16, %v51
  %vm57 = vcmp.ge.s32.totalorder %v17, %v51
  %vm58 = vcmp.ge.s32.totalorder %v16, %v52
  %vm59 = vcmp.ge.s32.totalorder %v17, %v52
  %vm60 = vcmp.ge.s32.totalorder %v16, %v53
  %vm61 = vcmp.ge.s32.totalorder %v17, %v53
  %v62 = vadd.s32 %v50, 16
  %v63 = vadd.s32 %v51, 16
  %v64 = vadd.s32 %v52, 16
  %v65 = vadd.s32 %v53, 16
  %vm66 = vcmp.lt.s32.totalorder %v16, %v62
  %vm67 = vcmp.lt.s32.totalorder %v17, %v62
  %vm68 = vcmp.lt.s32.totalorder %v16, %v63
  %vm69 = vcmp.lt.s32.totalorder %v17, %v63
  %vm70 = vcmp.lt.s32.totalorder %v16, %v64
  %vm71 = vcmp.lt.s32.totalorder %v17, %v64
  %vm72 = vcmp.lt.s32.totalorder %v16, %v65
  %vm73 = vcmp.lt.s32.totalorder %v17, %v65
  %vm74 = vmand %vm54, %vm66
  %vm75 = vmand %vm55, %vm67
  %vm76 = vmand %vm56, %vm68
  %vm77 = vmand %vm57, %vm69
  %vm78 = vmand %vm58, %vm70
  %vm79 = vmand %vm59, %vm71
  %vm80 = vmand %vm60, %vm72
  %vm81 = vmand %vm61, %vm73
  %v82 = vsel %vm74, 1, 0
  %v83 = vsel %vm75, 1, 0
  %v84 = vsel %vm76, 1, 0
  %v85 = vsel %vm77, 1, 0
  %v86 = vsel %vm78, 1, 0
  %v87 = vsel %vm79, 1, 0
  %v88 = vsel %vm80, 1, 0
  %v89 = vsel %vm81, 1, 0
  %v90 = vcvt.s32.f32 %v82
  %v91 = vcvt.s32.f32 %v83
  %v92 = vcvt.s32.f32 %v84
  %v93 = vcvt.s32.f32 %v85
  %v94 = vcvt.s32.f32 %v86
  %v95 = vcvt.s32.f32 %v87
  %v96 = vcvt.s32.f32 %v88
  %v97 = vcvt.s32.f32 %v89
  %v98 = vpack.c.bf16 %v92, %v90
  %v99 = vpack.c.bf16 %v93, %v91
  %v100 = vpack.c.bf16 %v96, %v94
  %v101 = vpack.c.bf16 %v97, %v95
  %v102 = vsel %vm33, %v21, 0
  %v103 = vsel %vm34, %v21, 0
  %v104 = vsel %vm35, %v22, 0
  %v105 = vsel %vm36, %v22, 0
  %v106 = vadd.s32 %v102, %v104
  %v107 = vrot.slane %v106, 4
  %v108 = vadd.s32 %v106, %v107
  %v109 = vrot.slane %v108, 2
  %v110 = vadd.s32 %v108, %v109
  %v111 = vrot.slane %v110, 1
  %v112 = vadd.s32 %v110, %v111
  %v113 = vadd.s32 %v103, %v105
  %v114 = vrot.slane %v113, 4
  %v115 = vadd.s32 %v113, %v114
  %v116 = vrot.slane %v115, 2
  %v117 = vadd.s32 %v115, %v116
  %v118 = vrot.slane %v117, 1
  %v119 = vadd.s32 %v117, %v118
  %v120 = vsub.s32 %v16, %v112
  %v121 = vsub.s32 %v17, %v119
  %vm122 = vcmp.eq.s32.totalorder %v120, %v46
  %vm123 = vcmp.eq.s32.totalorder %v121, %v46
  %vm124 = vcmp.eq.s32.totalorder %v120, %v47
  %vm125 = vcmp.eq.s32.totalorder %v121, %v47
  %vm126 = vcmp.eq.s32.totalorder %v120, %v48
  %vm127 = vcmp.eq.s32.totalorder %v121, %v48
  %vm128 = vcmp.eq.s32.totalorder %v120, %v49
  %vm129 = vcmp.eq.s32.totalorder %v121, %v49
  %v130 = vsel %vm122, 1, 0
  %v131 = vsel %vm123, 1, 0
  %v132 = vsel %vm124, 1, 0
  %v133 = vsel %vm125, 1, 0
  %v134 = vsel %vm126, 1, 0
  %v135 = vsel %vm127, 1, 0
  %v136 = vsel %vm128, 1, 0
  %v137 = vsel %vm129, 1, 0
  %v138 = vcvt.s32.f32 %v130
  %v139 = vcvt.s32.f32 %v131
  %v140 = vcvt.s32.f32 %v132
  %v141 = vcvt.s32.f32 %v133
  %v142 = vcvt.s32.f32 %v134
  %v143 = vcvt.s32.f32 %v135
  %v144 = vcvt.s32.f32 %v136
  %v145 = vcvt.s32.f32 %v137
  %v146 = vpack.c.bf16 %v140, %v138
  %v147 = vpack.c.bf16 %v141, %v139
  %v148 = vpack.c.bf16 %v144, %v142
  %v149 = vpack.c.bf16 %v145, %v143
  %v150 = vld [vmem:[%s1] sm:$0xf]
  %vm151 = vcmask 261120
  %v153 = vsel %vm151, %v150, 0
  %155 = vmatpush.bf16.msra.mxu0 0
  %156 = vmatpush.bf16.msra.mxu0 0
  %157 = vmatpush.bf16.msra.mxu0 0
  %158 = vmatpush.bf16.msra.mxu0 0
  %159 = vmatpush.bf16.msra.mxu0 0
  %160 = vmatpush.bf16.msra.mxu0 0
  %161 = vmatpush.bf16.msra.mxu0 %v100
  %162 = vmatpush.bf16.msra.mxu0 %v98
  %163 = vmatmul.bf16.gmra.mxu0 %v153
  %v164 = vpop.f32.mrf.mxu0
  %v165 = vadd.f32 0.0, %v164
  %v166 = vpop.f32.mrf.mxu0
  %167 = vdwg.mxu0
  %168 = vmatpush.bf16.msra.mxu0 0
  %169 = vmatpush.bf16.msra.mxu0 0
  %170 = vmatpush.bf16.msra.mxu0 0
  %171 = vmatpush.bf16.msra.mxu0 0
  %172 = vmatpush.bf16.msra.mxu0 0
  %173 = vmatpush.bf16.msra.mxu0 0
  %174 = vmatpush.bf16.msra.mxu0 %v101
  %175 = vmatpush.bf16.msra.mxu0 %v99
  %176 = vmatmul.bf16.gmra.mxu0 %v153
  %v177 = vpop.f32.mrf.mxu0
  %v178 = vadd.f32 0.0, %v177
  %v179 = vpop.f32.mrf.mxu0
  %180 = vdwg.mxu0
  %v181 = vld [vmem:[%s2] sm:$0xf]
  %v183 = vsel %vm151, %v181, 0
  %185 = vmatpush.bf16.msra.mxu0 0
  %186 = vmatpush.bf16.msra.mxu0 0
  %187 = vmatpush.bf16.msra.mxu0 0
  %188 = vmatpush.bf16.msra.mxu0 0
  %189 = vmatpush.bf16.msra.mxu0 0
  %190 = vmatpush.bf16.msra.mxu0 0
  %191 = vmatpush.bf16.msra.mxu0 %v148
  %192 = vmatpush.bf16.msra.mxu0 %v146
  %193 = vmatmul.bf16.gmra.mxu0 %v183
  %v194 = vpop.f32.mrf.mxu0
  %v195 = vadd.f32 0.0, %v194
  %v196 = vpop.f32.mrf.mxu0
  %197 = vdwg.mxu0
  %198 = vmatpush.bf16.msra.mxu0 0
  %199 = vmatpush.bf16.msra.mxu0 0
  %200 = vmatpush.bf16.msra.mxu0 0
  %201 = vmatpush.bf16.msra.mxu0 0
  %202 = vmatpush.bf16.msra.mxu0 0
  %203 = vmatpush.bf16.msra.mxu0 0
  %204 = vmatpush.bf16.msra.mxu0 %v149
  %205 = vmatpush.bf16.msra.mxu0 %v147
  %206 = vmatmul.bf16.gmra.mxu0 %v183
  %v207 = vpop.f32.mrf.mxu0
  %v208 = vadd.f32 0.0, %v207
  %v209 = vpop.f32.mrf.mxu0
  %210 = vdwg.mxu0
  %v211 = vld [vmem:[%s0] sm:$0xff]
  %v212 = vld [vmem:[%s0 + $0x8] sm:$0xff]
  %v213 = vmul.f32 %v211, %v165
  %v214 = vmul.f32 %v212, %v178
  %v215 = vmul.f32 %v213, %v195
  %v216 = vmul.f32 %v214, %v208
  %217 = vst [vmem:[%s3] sm:$0xff] %v215
  %218 = vst [vmem:[%s3 + $0x8] sm:$0xff] %v216
  // Predicated region
  $region14: #{coord_att.1} parent=0 // pred_check
    _
  $region15: #{coord_att.1} parent=0 // pred_check_branch
    %220 = sbr.rel (0) target = $region17
  $region16: #{coord_att.1} parent=0 // pred_region
    _
  $region17: #{coord_att.1} parent=0 // pred_fallthru
    _
  // Predicated region
  $region18: #{coord_att.1} parent=0 // pred_check
    _
  $region19: #{coord_att.1} parent=0 // pred_check_branch
    %222 = sbr.rel (0) target = $region21
  $region20: #{coord_att.1} parent=0 // pred_region
    _
  $region21: #{coord_att.1} parent=0 // pred_fallthru
    _

</llo_original>
